<compile_context>
chip_gen: v6e
topology: v6e:2x2x1
jax: 0.10.0
libtpu: 0.0.40
codegen_flags: <defaults>
</compile_context>

<pallas_src>
import functools

import jax
import jax.numpy as jnp
from jax.experimental import pallas as pl
from jax.experimental.pallas import tpu as pltpu


def _round_up(x, m):
    return (x + m - 1) // m * m


def _attn_weight(a, beta):
    """(1 + a)^beta with cheap VPU fast paths for common betas."""
    base = 1.0 + a
    if beta == 0.0:
        return jnp.ones_like(a)
    if beta == 1.0:
        return base
    if beta == 2.0:
        return base * base
    if float(beta).is_integer() and 0.0 < beta <= 4.0:
        w = base
        for _ in range(int(beta) - 1):
            w = w * base
        return w
    return jnp.power(base, beta)


def _row_mask(tile_b, true_b):
    """(tile_b, 1) bool mask of in-bounds rows for the current batch tile.
    Returns None when every tile is full (B divisible by tile_b)."""
    if true_b % tile_b == 0:
        return None
    i = pl.program_id(0)
    row = jax.lax.broadcasted_iota(jnp.int32, (tile_b, 1), 0)
    return (row + i * tile_b) < true_b


def _edge_loss_kernel(et_ref, ef_ref, rt_ref, rf_ref, at_ref, af_ref, p4_ref,
                      out_ref, *, beta, true_b, tile_b, inv_2bd, inv_2bc):
    """General path: predictions supplied as one (4, tile_b, C) block."""
    f32 = jnp.float32
    et = et_ref[...].astype(f32)
    ef = ef_ref[...].astype(f32)
    rt = rt_ref[...].astype(f32)
    rf = rf_ref[...].astype(f32)
    at = at_ref[...].astype(f32)
    af = af_ref[...].astype(f32)

    mask = _row_mask(tile_b, true_b)

    d_to = et - rt
    d_from = ef - rf
    recon_terms = (_attn_weight(at, beta) * d_to * d_to
                   + _attn_weight(af, beta) * d_from * d_from)
    if mask is not None:
        recon_terms = jnp.where(mask, recon_terms, 0.0)
    s_recon = jnp.sum(recon_terms)

    dp_to = p4_ref[0].astype(f32) - p4_ref[2].astype(f32)
    dp_from = p4_ref[1].astype(f32) - p4_ref[3].astype(f32)
    pred_terms = dp_to * dp_to + dp_from * dp_from
    if mask is not None:
        pred_terms = jnp.where(mask, pred_terms, 0.0)
    s_pred = jnp.sum(pred_terms)

    contrib = s_recon * inv_2bd + s_pred * inv_2bc
    out_ref[...] = jnp.full(out_ref.shape, contrib, dtype=jnp.float32)


def _edge_loss_fused_kernel(et_ref, ef_ref, rt_ref, rf_ref, at_ref, af_ref,
                            w_ref, b_ref, out_ref, *, beta, true_b, tile_b,
                            inv_2bd, inv_2bc):
    """Fused path: get_pred is a linear head (W, b) computed on the MXU here."""
    f32 = jnp.float32
    et = et_ref[...].astype(f32)
    ef = ef_ref[...].astype(f32)
    rt = rt_ref[...].astype(f32)
    rf = rf_ref[...].astype(f32)
    at = at_ref[...].astype(f32)
    af = af_ref[...].astype(f32)

    mask = _row_mask(tile_b, true_b)

    d_to = et - rt
    d_from = ef - rf
    recon_terms = (_attn_weight(at, beta) * d_to * d_to
                   + _attn_weight(af, beta) * d_from * d_from)
    if mask is not None:
        recon_terms = jnp.where(mask, recon_terms, 0.0)
    s_recon = jnp.sum(recon_terms)

    # get_pred fused as a linear head on the otherwise-idle MXU.
    w = w_ref[...].astype(f32)
    b = b_ref[...].astype(f32)
    pred_to = jnp.dot(et, w, preferred_element_type=f32) + b
    pred_from = jnp.dot(ef, w, preferred_element_type=f32) + b
    recon_pred_to = jnp.dot(rt, w, preferred_element_type=f32) + b
    recon_pred_from = jnp.dot(rf, w, preferred_element_type=f32) + b
    dp_to = pred_to - recon_pred_to
    dp_from = pred_from - recon_pred_from
    pred_terms = dp_to * dp_to + dp_from * dp_from
    if mask is not None:
        pred_terms = jnp.where(mask, pred_terms, 0.0)
    s_pred = jnp.sum(pred_terms)

    contrib = s_recon * inv_2bd + s_pred * inv_2bc
    out_ref[...] = jnp.full(out_ref.shape, contrib, dtype=jnp.float32)


def _pick_tile_b(B, row_bytes, tile_b=None, vmem_budget_bytes=16 * 1024 * 1024):
    """Batch-tile rows: sized from a VMEM budget (double-buffered streams),
    forced to a multiple of 8, and split so the grid has >= 2 tiles when auto."""
    auto = tile_b is None
    if auto:
        tile_b = max(8, vmem_budget_bytes // max(1, 2 * row_bytes))
        tile_b = min(tile_b, 8192)
        if tile_b >= B and B > 8:           # prefer >=2 tiles (v7x 2-TC sharding)
            tile_b = -(-B // 2)
    tile_b = int(min(tile_b, _round_up(B, 8)))
    tile_b = max(8, (tile_b // 8) * 8)
    return tile_b


def _launch(kernel, inputs, in_specs, B, tile_b):
    num_tiles = -(-B // tile_b)
    out_spec = pl.BlockSpec((1, 1, 128), lambda i: (i, 0, 0))
    partials = pl.pallas_call(
        kernel,
        out_shape=jax.ShapeDtypeStruct((num_tiles, 1, 128), jnp.float32),
        grid=(num_tiles,),
        in_specs=in_specs,
        out_specs=out_spec,
        compiler_params=pltpu.CompilerParams(
            dimension_semantics=("parallel",),
            vmem_limit_bytes=48 * 1024 * 1024),
    )(*inputs)
    return jnp.sum(partials[:, 0, 0])


def reconstruction_pred_edge_loss(edge_to, edge_from, recon_to, recon_from,
                                  a_to, a_from, preds4, beta=1.0, tile_b=None):
    """Loss given precomputed classifier outputs preds4 of shape (4, B, C):
    preds4[0]=pred(edge_to), [1]=pred(edge_from), [2]=pred(recon_to), [3]=pred(recon_from)."""
    B, D = edge_to.shape
    C = preds4.shape[-1]
    row_bytes = 6 * D * edge_to.dtype.itemsize + 4 * C * preds4.dtype.itemsize
    tile_b = _pick_tile_b(B, row_bytes, tile_b)

    feat_spec = pl.BlockSpec((tile_b, D), lambda i: (i, 0))
    pred_spec = pl.BlockSpec((4, tile_b, C), lambda i: (0, i, 0))
    kernel = functools.partial(
        _edge_loss_kernel, beta=float(beta), true_b=B, tile_b=tile_b,
        inv_2bd=1.0 / (2.0 * B * D), inv_2bc=1.0 / (2.0 * B * C))
    inputs = (edge_to, edge_from, recon_to, recon_from, a_to, a_from, preds4)
    return _launch(kernel, inputs, [feat_spec] * 6 + [pred_spec], B, tile_b)


def reconstruction_pred_edge_loss_fused_linear(edge_to, edge_from, recon_to,
                                               recon_from, a_to, a_from,
                                               w_cls, b_cls, beta=1.0,
                                               tile_b=None):
    """Loss with get_pred fused in-kernel as a linear head x @ W + b."""
    B, D = edge_to.shape
    C = w_cls.shape[-1]
    b_cls = jnp.reshape(b_cls, (1, C))
    row_bytes = 6 * D * edge_to.dtype.itemsize
    tile_b = _pick_tile_b(B, row_bytes, tile_b)

    feat_spec = pl.BlockSpec((tile_b, D), lambda i: (i, 0))
    w_spec = pl.BlockSpec((D, C), lambda i: (0, 0))
    b_spec = pl.BlockSpec((1, C), lambda i: (0, 0))
    kernel = functools.partial(
        _edge_loss_fused_kernel, beta=float(beta), true_b=B, tile_b=tile_b,
        inv_2bd=1.0 / (2.0 * B * D), inv_2bc=1.0 / (2.0 * B * C))
    inputs = (edge_to, edge_from, recon_to, recon_from, a_to, a_from,
              w_cls, b_cls)
    return _launch(kernel, inputs, [feat_spec] * 6 + [w_spec, b_spec], B, tile_b)


def reconstruction_pred_edge_loss_forward(edge_to, edge_from, recon_to,
                                          recon_from, a_to, a_from, *,
                                          get_pred_fn=None, pred_head=None,
                                          beta=1.0, alpha=0.5, tile_b=None):
    """Mirrors ReconstructionPredEdgeLoss.forward (alpha unused, as in the module)."""
    del alpha
    if pred_head is not None:
        w_cls, b_cls = pred_head
        return reconstruction_pred_edge_loss_fused_linear(
            edge_to, edge_from, recon_to, recon_from, a_to, a_from,
            w_cls, b_cls, beta=beta, tile_b=tile_b)
    # TODO(synk): data_provider.get_pred is a host-side classifier in the
    #             original module; here it must be a JAX callable.
    concat = jnp.concatenate([edge_to, edge_from, recon_to, recon_from], axis=0)
    B = edge_to.shape[0]
    preds4 = get_pred_fn(concat).reshape(4, B, -1)   # contiguity-preserving
    return reconstruction_pred_edge_loss(edge_to, edge_from, recon_to,
                                         recon_from, a_to, a_from, preds4,
                                         beta=beta, tile_b=tile_b)


def _reference_loss(edge_to, edge_from, recon_to, recon_from, a_to, a_from,
                    p_to, p_from, rp_to, rp_from, beta=1.0):
    loss1 = jnp.mean(jnp.mean(jnp.power(1.0 + a_to, beta) * (edge_to - recon_to) ** 2, axis=1))
    loss2 = jnp.mean(jnp.mean(jnp.power(1.0 + a_from, beta) * (edge_from - recon_from) ** 2, axis=1))
    loss1p = jnp.mean(jnp.mean((p_to - rp_to) ** 2, axis=1))
    loss2p = jnp.mean(jnp.mean((p_from - rp_from) ** 2, axis=1))
    return (loss1 + loss2) / 2.0 + (loss1p + loss2p) / 2.0


if __name__ == "__main__":
    key = jax.random.PRNGKey(0)
    ks = jax.random.split(key, 8)

    B, D, C = 16, 32, 10                       # small demo: batch=16, feat=32, classes=10
    edge_to = jax.random.normal(ks[0], (B, D), jnp.float32)
    edge_from = jax.random.normal(ks[1], (B, D), jnp.float32)
    recon_to = edge_to + 0.1 * jax.random.normal(ks[2], (B, D), jnp.float32)
    recon_from = edge_from + 0.1 * jax.random.normal(ks[3], (B, D), jnp.float32)
    a_to = jax.random.uniform(ks[4], (B, D), jnp.float32)
    a_from = jax.random.uniform(ks[5], (B, D), jnp.float32)

    # Stand-in for data_provider.get_pred: a fixed deterministic linear head.
    w_cls = 0.1 * jax.random.normal(ks[6], (D, C), jnp.float32)
    b_cls = 0.01 * jax.random.normal(ks[7], (1, C), jnp.float32)
    get_pred_fn = lambda x: x @ w_cls + b_cls

    # Path 1: get_pred fused in-kernel (tile_b=8 -> 2 batch tiles, no ragged tail).
    loss_fused = reconstruction_pred_edge_loss_forward(
        edge_to, edge_from, recon_to, recon_from, a_to, a_from,
        pred_head=(w_cls, b_cls), beta=1.0, tile_b=8)

    # Path 2: externally supplied predictions, ragged batch (13 rows, tile_b=8)
    # to exercise the in-kernel row masking of the last (partial) tile.
    Br = 13
    loss_ragged = reconstruction_pred_edge_loss_forward(
        edge_to[:Br], edge_from[:Br], recon_to[:Br], recon_from[:Br],
        a_to[:Br], a_from[:Br], get_pred_fn=get_pred_fn, beta=1.0, tile_b=8)

    jax.block_until_ready((loss_fused, loss_ragged))

    # Pure-JAX references.
    def ref_for(n):
        concat = jnp.concatenate([edge_to[:n], edge_from[:n],
                                  recon_to[:n], recon_from[:n]], axis=0)
        preds = get_pred_fn(concat)
        return _reference_loss(edge_to[:n], edge_from[:n], recon_to[:n],
                               recon_from[:n], a_to[:n], a_from[:n],
                               preds[:n], preds[n:2 * n],
                               preds[2 * n:3 * n], preds[3 * n:], beta=1.0)

    ref_full = ref_for(B)
    ref_ragged = ref_for(Br)

    assert loss_fused.shape == () and bool(jnp.isfinite(loss_fused))
    assert loss_ragged.shape == () and bool(jnp.isfinite(loss_ragged))
    assert abs(float(loss_fused) - float(ref_full)) < 1e-5 * max(1.0, abs(float(ref_full)))
    assert abs(float(loss_ragged) - float(ref_ragged)) < 1e-5 * max(1.0, abs(float(ref_ragged)))
    print("KERNEL_OK")
</pallas_src>

<mosaic_0001>
module attributes {stable_mosaic.version = 11 : i64} {
  func.func @_edge_loss_fused_kernel(%arg0: i32, %arg1: memref<8x32xf32, #tpu.memory_space<vmem>>, %arg2: memref<8x32xf32, #tpu.memory_space<vmem>>, %arg3: memref<8x32xf32, #tpu.memory_space<vmem>>, %arg4: memref<8x32xf32, #tpu.memory_space<vmem>>, %arg5: memref<8x32xf32, #tpu.memory_space<vmem>>, %arg6: memref<8x32xf32, #tpu.memory_space<vmem>>, %arg7: memref<32x10xf32, #tpu.memory_space<vmem>>, %arg8: memref<1x10xf32, #tpu.memory_space<vmem>>, %arg9: memref<1x1x128xf32, #tpu.memory_space<vmem>>) attributes {dimension_semantics = [#tpu.dimension_semantics<parallel>], iteration_bounds = array<i64: 2>, scalar_prefetch = 0 : i64, scratch_operands = 0 : i64, tpu.core_type = #tpu.core_type<tc>, window_params = [{transform_indices = @transform_0, window_bounds = array<i64: 8, 32>}, {transform_indices = @transform_1, window_bounds = array<i64: 8, 32>}, {transform_indices = @transform_2, window_bounds = array<i64: 8, 32>}, {transform_indices = @transform_3, window_bounds = array<i64: 8, 32>}, {transform_indices = @transform_4, window_bounds = array<i64: 8, 32>}, {transform_indices = @transform_5, window_bounds = array<i64: 8, 32>}, {pipeline_mode = #tpu.pipeline_mode<synchronous>, transform_indices = @transform_6, window_bounds = array<i64: 32, 10>}, {pipeline_mode = #tpu.pipeline_mode<synchronous>, transform_indices = @transform_7, window_bounds = array<i64: 1, 10>}, {transform_indices = @transform_8, window_bounds = array<i64: 1, 1, 128>}]} {
    %c0 = arith.constant 0 : index
    %c0_0 = arith.constant 0 : index
    %0 = vector.load %arg1[%c0, %c0_0] : memref<8x32xf32, #tpu.memory_space<vmem>>, vector<8x32xf32>
    %c0_1 = arith.constant 0 : index
    %c0_2 = arith.constant 0 : index
    %1 = vector.load %arg2[%c0_1, %c0_2] : memref<8x32xf32, #tpu.memory_space<vmem>>, vector<8x32xf32>
    %c0_3 = arith.constant 0 : index
    %c0_4 = arith.constant 0 : index
    %2 = vector.load %arg3[%c0_3, %c0_4] : memref<8x32xf32, #tpu.memory_space<vmem>>, vector<8x32xf32>
    %c0_5 = arith.constant 0 : index
    %c0_6 = arith.constant 0 : index
    %3 = vector.load %arg4[%c0_5, %c0_6] : memref<8x32xf32, #tpu.memory_space<vmem>>, vector<8x32xf32>
    %c0_7 = arith.constant 0 : index
    %c0_8 = arith.constant 0 : index
    %4 = vector.load %arg5[%c0_7, %c0_8] : memref<8x32xf32, #tpu.memory_space<vmem>>, vector<8x32xf32>
    %c0_9 = arith.constant 0 : index
    %c0_10 = arith.constant 0 : index
    %5 = vector.load %arg6[%c0_9, %c0_10] : memref<8x32xf32, #tpu.memory_space<vmem>>, vector<8x32xf32>
    %6 = arith.subf %0, %2 : vector<8x32xf32>
    %7 = arith.subf %1, %3 : vector<8x32xf32>
    %cst = arith.constant 1.000000e+00 : f32
    %8 = vector.broadcast %cst : f32 to vector<8x32xf32>
    %9 = arith.addf %8, %4 : vector<8x32xf32>
    %10 = arith.mulf %9, %6 : vector<8x32xf32>
    %11 = arith.mulf %10, %6 : vector<8x32xf32>
    %cst_11 = arith.constant 1.000000e+00 : f32
    %12 = vector.broadcast %cst_11 : f32 to vector<8x32xf32>
    %13 = arith.addf %12, %5 : vector<8x32xf32>
    %14 = arith.mulf %13, %7 : vector<8x32xf32>
    %15 = arith.mulf %14, %7 : vector<8x32xf32>
    %16 = arith.addf %11, %15 : vector<8x32xf32>
    %17 = vector.shape_cast %16 : vector<8x32xf32> to vector<1x8x32xf32>
    %cst_12 = arith.constant dense<0.000000e+00> : vector<1xf32>
    %18 = vector.multi_reduction <add>, %17, %cst_12 [1, 2] : vector<1x8x32xf32> to vector<1xf32>
    %19 = vector.shape_cast %18 : vector<1xf32> to vector<1x1x1xf32>
    %20 = vector.extract %19[0, 0, 0] : f32 from vector<1x1x1xf32>
    %c0_13 = arith.constant 0 : index
    %c0_14 = arith.constant 0 : index
    %21 = vector.load %arg7[%c0_13, %c0_14] : memref<32x10xf32, #tpu.memory_space<vmem>>, vector<32x10xf32>
    %c0_15 = arith.constant 0 : index
    %c0_16 = arith.constant 0 : index
    %22 = vector.load %arg8[%c0_15, %c0_16] : memref<1x10xf32, #tpu.memory_space<vmem>>, vector<1x10xf32>
    %cst_17 = arith.constant dense<0.000000e+00> : vector<8x10xf32>
    %23 = tpu.matmul %0, %21, %cst_17 {dimension_numbers = #tpu.dot_dimension_numbers<[1], [0], [0], [1], [0, 0, 1, 1], [], []>} : vector<8x32xf32>, vector<32x10xf32>, vector<8x10xf32> -> vector<8x10xf32>
    %24 = vector.broadcast %22 : vector<1x10xf32> to vector<8x10xf32>
    %25 = arith.addf %23, %24 : vector<8x10xf32>
    %cst_18 = arith.constant dense<0.000000e+00> : vector<8x10xf32>
    %26 = tpu.matmul %1, %21, %cst_18 {dimension_numbers = #tpu.dot_dimension_numbers<[1], [0], [0], [1], [0, 0, 1, 1], [], []>} : vector<8x32xf32>, vector<32x10xf32>, vector<8x10xf32> -> vector<8x10xf32>
    %27 = vector.broadcast %22 : vector<1x10xf32> to vector<8x10xf32>
    %28 = arith.addf %26, %27 : vector<8x10xf32>
    %cst_19 = arith.constant dense<0.000000e+00> : vector<8x10xf32>
    %29 = tpu.matmul %2, %21, %cst_19 {dimension_numbers = #tpu.dot_dimension_numbers<[1], [0], [0], [1], [0, 0, 1, 1], [], []>} : vector<8x32xf32>, vector<32x10xf32>, vector<8x10xf32> -> vector<8x10xf32>
    %30 = vector.broadcast %22 : vector<1x10xf32> to vector<8x10xf32>
    %31 = arith.addf %29, %30 : vector<8x10xf32>
    %cst_20 = arith.constant dense<0.000000e+00> : vector<8x10xf32>
    %32 = tpu.matmul %3, %21, %cst_20 {dimension_numbers = #tpu.dot_dimension_numbers<[1], [0], [0], [1], [0, 0, 1, 1], [], []>} : vector<8x32xf32>, vector<32x10xf32>, vector<8x10xf32> -> vector<8x10xf32>
    %33 = vector.broadcast %22 : vector<1x10xf32> to vector<8x10xf32>
    %34 = arith.addf %32, %33 : vector<8x10xf32>
    %35 = arith.subf %25, %31 : vector<8x10xf32>
    %36 = arith.subf %28, %34 : vector<8x10xf32>
    %37 = arith.mulf %35, %35 : vector<8x10xf32>
    %38 = arith.mulf %36, %36 : vector<8x10xf32>
    %39 = arith.addf %37, %38 : vector<8x10xf32>
    %40 = vector.shape_cast %39 : vector<8x10xf32> to vector<1x8x10xf32>
    %cst_21 = arith.constant dense<0.000000e+00> : vector<1xf32>
    %41 = vector.multi_reduction <add>, %40, %cst_21 [1, 2] : vector<1x8x10xf32> to vector<1xf32>
    %42 = vector.shape_cast %41 : vector<1xf32> to vector<1x1x1xf32>
    %43 = vector.extract %42[0, 0, 0] : f32 from vector<1x1x1xf32>
    %cst_22 = arith.constant 9.765625E-4 : f32
    %44 = arith.mulf %20, %cst_22 : f32
    %cst_23 = arith.constant 3.125000e-03 : f32
    %45 = arith.mulf %43, %cst_23 : f32
    %46 = arith.addf %44, %45 : f32
    %47 = vector.broadcast %46 : f32 to vector<1x1x128xf32>
    %c0_24 = arith.constant 0 : index
    %c0_25 = arith.constant 0 : index
    %c0_26 = arith.constant 0 : index
    %48 = vector.load %arg9[%c0_24, %c0_25, %c0_26] : memref<1x1x128xf32, #tpu.memory_space<vmem>>, vector<1x1x128xf32>
    tpu.vector_store %arg9[%c0_24, %c0_25, %c0_26], %47 {strides = array<i32>} : memref<1x1x128xf32, #tpu.memory_space<vmem>>, vector<1x1x128xf32>,
    return
  }
  func.func @transform_0(%arg0: i32) -> (i32, i32) {
    %c0_i32 = arith.constant 0 : i32
    %c0_i32_0 = arith.constant 0 : i32
    return %arg0, %c0_i32 : i32, i32
  }
  func.func @transform_1(%arg0: i32) -> (i32, i32) {
    %c0_i32 = arith.constant 0 : i32
    %c0_i32_0 = arith.constant 0 : i32
    return %arg0, %c0_i32 : i32, i32
  }
  func.func @transform_2(%arg0: i32) -> (i32, i32) {
    %c0_i32 = arith.constant 0 : i32
    %c0_i32_0 = arith.constant 0 : i32
    return %arg0, %c0_i32 : i32, i32
  }
  func.func @transform_3(%arg0: i32) -> (i32, i32) {
    %c0_i32 = arith.constant 0 : i32
    %c0_i32_0 = arith.constant 0 : i32
    return %arg0, %c0_i32 : i32, i32
  }
  func.func @transform_4(%arg0: i32) -> (i32, i32) {
    %c0_i32 = arith.constant 0 : i32
    %c0_i32_0 = arith.constant 0 : i32
    return %arg0, %c0_i32 : i32, i32
  }
  func.func @transform_5(%arg0: i32) -> (i32, i32) {
    %c0_i32 = arith.constant 0 : i32
    %c0_i32_0 = arith.constant 0 : i32
    return %arg0, %c0_i32 : i32, i32
  }
  func.func @transform_6(%arg0: i32) -> (i32, i32) {
    %c0_i32 = arith.constant 0 : i32
    %c0_i32_0 = arith.constant 0 : i32
    %c0_i32_1 = arith.constant 0 : i32
    return %c0_i32, %c0_i32_0 : i32, i32
  }
  func.func @transform_7(%arg0: i32) -> (i32, i32) {
    %c0_i32 = arith.constant 0 : i32
    %c0_i32_0 = arith.constant 0 : i32
    %c0_i32_1 = arith.constant 0 : i32
    return %c0_i32, %c0_i32_0 : i32, i32
  }
  func.func @transform_8(%arg0: i32) -> (i32, i32, i32) {
    %c0_i32 = arith.constant 0 : i32
    %c0_i32_0 = arith.constant 0 : i32
    %c0_i32_1 = arith.constant 0 : i32
    return %arg0, %c0_i32, %c0_i32_0 : i32, i32, i32
  }
}

</mosaic_0001>

<llo_original>
// kernel: tpu_custom_call.1
$region0: #{tpu_custom_call.1}
  #allocation0 [shape = 'u32[]', space=smem, size = 0x4, offset = 0x4, fixed_abs, tag = 'smem constant byte address 0x4 - core index']
  #allocation1 [shape = 'u32[144,128]{1,0:T(1,128)}', space=vmem, size = 0x12000, scoped, tag = 'internal scratch']
  %s0 = inlined_call_operand.vmem [shape: f32[16,32], index: 0, kind: input, shape index: {}]
  %s1 = inlined_call_operand.vmem [shape: f32[16,32], index: 1, kind: input, shape index: {}]
  %s2 = inlined_call_operand.vmem [shape: f32[16,32], index: 2, kind: input, shape index: {}]
  %s3 = inlined_call_operand.hbm [shape: f32[16,32], index: 3, kind: input, shape index: {}]
  %s4 = inlined_call_operand.hbm [shape: f32[16,32], index: 4, kind: input, shape index: {}]
  %s5 = inlined_call_operand.hbm [shape: f32[16,32], index: 5, kind: input, shape index: {}]
  %s6 = inlined_call_operand.vmem [shape: f32[32,10], index: 6, kind: input, shape index: {}]
  %s7 = inlined_call_operand.vmem [shape: f32[1,10], index: 7, kind: input, shape index: {}]
  %s8 = inlined_call_operand.hbm [shape: f32[2,1,128], index: 8, kind: output, shape index: {}]
  %s9 = sld [smem:[#allocation0]]
  $region77: #{tpu_custom_call.1} parent=0
    _
  %s11 = ssub.s32 1, %s9
  %s12 = scalar_select 0, %s11, %s9
  $region1: #{tpu_custom_call.1} parent=0
    #allocation2 [shape = 'u8[8192]{0}', space=vmem, size = 0x2000, scoped, tag = 'input window, operand 3']
    #allocation3 [shape = 's32[2]{0}', space=sflag, size = 0x8, scoped, tag = 'scoped memory for tpu_custom_call.1']
    #allocation4 [shape = 's32[2]{0}', space=sflag, size = 0x8, scoped, tag = 'scoped memory for tpu_custom_call.1']
    #allocation5 [shape = 'u8[8192]{0}', space=vmem, size = 0x2000, scoped, tag = 'input window, operand 4']
    #allocation6 [shape = 's32[2]{0}', space=sflag, size = 0x8, scoped, tag = 'scoped memory for tpu_custom_call.1']
    #allocation7 [shape = 'u8[8192]{0}', space=vmem, size = 0x2000, scoped, tag = 'input window, operand 5']
    #allocation8 [shape = 'u8[1024]{0}', space=vmem, size = 0x400, scoped, tag = 'output window, operand 0']
    %13 = vsyncpa [#allocation3], 0
    %s14 = scalar_lea.sflag [#allocation3], 1
    %15 = vsyncpa %s14, 0
    %16 = vsyncpa [#allocation6], 0
    %s17 = scalar_lea.sflag [#allocation6], 1
    %18 = vsyncpa %s17, 0
    %19 = vsyncpa [#allocation4], 0
    %s20 = scalar_lea.sflag [#allocation4], 1
    %21 = vsyncpa %s20, 0
    loop: start=0, step=1, limit=4
    $region2: #{tpu_custom_call.1} parent=1 // loop_pre_header
      _
    $region3: #{tpu_custom_call.1} parent=1 // loop_header
      %s23 = sphi 0, %s27
      %p24 = scmp.ge.s32.totalorder %s23, 4
      %s33 = sphi 0, %s35
      %s36 = sphi 0, %s33
      %s37 = sphi 0, %s36
      %s53 = sphi 0, %s37
      %s59 = sphi 0, %s61
      %s62 = sphi 0, %s59
      %s63 = sphi 0, %s62
      %s79 = sphi 0, %s63
      %s85 = sphi 0, %s87
      %s88 = sphi 0, %s85
      %s89 = sphi 0, %s88
      %s105 = sphi 0, %s89
      %s111 = sphi 0, %s113
      %s114 = sphi 0, %s111
      %s115 = sphi 0, %s114
      %s131 = sphi 0, %s115
      %s137 = sphi 0, %s139
      %s140 = sphi 0, %s137
      %s141 = sphi 0, %s140
      %s157 = sphi 0, %s141
      %s163 = sphi 0, %s165
      %s166 = sphi 0, %s163
      %s167 = sphi 0, %s166
      %s183 = sphi 0, %s167
      %s187 = sphi 0, %s187
      %s189 = sphi 0, %s187
      %s190 = sphi 0, %s189
      %s204 = sphi 0, %s190
      %s208 = sphi 0, %s208
      %s210 = sphi 0, %s208
      %s211 = sphi 0, %s210
      %s225 = sphi 0, %s211
      %s231 = sphi 0, %s233
      %s234 = sphi 0, %s231
      %s235 = sphi 0, %s234
      %s251 = sphi 0, %s235
    $region4: #{tpu_custom_call.1} parent=1 // loop_header_branch
      %26 = sbr.rel (%p24) target = $region8
    $region5: #{tpu_custom_call.1} parent=1 // loop_body
      %s28 = ssub.s32 %s23, 1
      %s29 = ssub.s32 %s23, 2
      %s30 = sadd.s32 %s23, 1
      %s31 = ssub.s32 %s23, %s30
      %p32 = scmp.eq.s32.totalorder %s31, 0
      %s34 = sadd.s32 %s33, 1
      %s35 = scalar_select %p32, %s33, %s34
      %p38 = pneg %p32
      %p39 = scmp.eq.s32.totalorder %s23, 1
      %p40 = por %p38, %p39
      %p41 = scmp.ne.s32.totalorder %s33, %s36
      %p42 = scmp.eq.s32.totalorder %s23, 0
      %p43 = por %p41, %p42
      %p44 = scmp.ne.s32.totalorder %s33, %s36
      %p45 = scmp.eq.s32.totalorder %s28, 1
      %p46 = por %p44, %p45
      %p47 = scmp.ne.s32.totalorder %s36, %s37
      %p48 = scmp.eq.s32.totalorder %s28, 0
      %p49 = por %p47, %p48
      %p50 = scmp.ne.s32.totalorder %s36, %s37
      %p51 = scmp.eq.s32.totalorder %s29, 1
      %p52 = por %p50, %p51
      %p54 = scmp.ne.s32.totalorder %s37, %s53
      %p55 = scmp.eq.s32.totalorder %s29, 0
      %p56 = por %p54, %p55
      %s57 = ssub.s32 %s23, %s30
      %p58 = scmp.eq.s32.totalorder %s57, 0
      %s60 = sadd.s32 %s59, 1
      %s61 = scalar_select %p58, %s59, %s60
      %p64 = pneg %p58
      %p65 = scmp.eq.s32.totalorder %s23, 1
      %p66 = por %p64, %p65
      %p67 = scmp.ne.s32.totalorder %s59, %s62
      %p68 = scmp.eq.s32.totalorder %s23, 0
      %p69 = por %p67, %p68
      %p70 = scmp.ne.s32.totalorder %s59, %s62
      %p71 = scmp.eq.s32.totalorder %s28, 1
      %p72 = por %p70, %p71
      %p73 = scmp.ne.s32.totalorder %s62, %s63
      %p74 = scmp.eq.s32.totalorder %s28, 0
      %p75 = por %p73, %p74
      %p76 = scmp.ne.s32.totalorder %s62, %s63
      %p77 = scmp.eq.s32.totalorder %s29, 1
      %p78 = por %p76, %p77
      %p80 = scmp.ne.s32.totalorder %s63, %s79
      %p81 = scmp.eq.s32.totalorder %s29, 0
      %p82 = por %p80, %p81
      %s83 = ssub.s32 %s23, %s30
      %p84 = scmp.eq.s32.totalorder %s83, 0
      %s86 = sadd.s32 %s85, 1
      %s87 = scalar_select %p84, %s85, %s86
      %p90 = pneg %p84
      %p91 = scmp.eq.s32.totalorder %s23, 1
      %p92 = por %p90, %p91
      %p93 = scmp.ne.s32.totalorder %s85, %s88
      %p94 = scmp.eq.s32.totalorder %s23, 0
      %p95 = por %p93, %p94
      %p96 = scmp.ne.s32.totalorder %s85, %s88
      %p97 = scmp.eq.s32.totalorder %s28, 1
      %p98 = por %p96, %p97
      %p99 = scmp.ne.s32.totalorder %s88, %s89
      %p100 = scmp.eq.s32.totalorder %s28, 0
      %p101 = por %p99, %p100
      %p102 = scmp.ne.s32.totalorder %s88, %s89
      %p103 = scmp.eq.s32.totalorder %s29, 1
      %p104 = por %p102, %p103
      %p106 = scmp.ne.s32.totalorder %s89, %s105
      %p107 = scmp.eq.s32.totalorder %s29, 0
      %p108 = por %p106, %p107
      %s109 = ssub.s32 %s23, %s30
      %p110 = scmp.eq.s32.totalorder %s109, 0
      %s112 = sadd.s32 %s111, 1
      %s113 = scalar_select %p110, %s111, %s112
      %p116 = pneg %p110
      %p117 = scmp.eq.s32.totalorder %s23, 1
      %p118 = por %p116, %p117
      %p119 = scmp.ne.s32.totalorder %s111, %s114
      %p120 = scmp.eq.s32.totalorder %s23, 0
      %p121 = por %p119, %p120
      %p122 = scmp.ne.s32.totalorder %s111, %s114
      %p123 = scmp.eq.s32.totalorder %s28, 1
      %p124 = por %p122, %p123
      %p125 = scmp.ne.s32.totalorder %s114, %s115
      %p126 = scmp.eq.s32.totalorder %s28, 0
      %p127 = por %p125, %p126
      %p128 = scmp.ne.s32.totalorder %s114, %s115
      %p129 = scmp.eq.s32.totalorder %s29, 1
      %p130 = por %p128, %p129
      %p132 = scmp.ne.s32.totalorder %s115, %s131
      %p133 = scmp.eq.s32.totalorder %s29, 0
      %p134 = por %p132, %p133
      %s135 = ssub.s32 %s23, %s30
      %p136 = scmp.eq.s32.totalorder %s135, 0
      %s138 = sadd.s32 %s137, 1
      %s139 = scalar_select %p136, %s137, %s138
      %p142 = pneg %p136
      %p143 = scmp.eq.s32.totalorder %s23, 1
      %p144 = por %p142, %p143
      %p145 = scmp.ne.s32.totalorder %s137, %s140
      %p146 = scmp.eq.s32.totalorder %s23, 0
      %p147 = por %p145, %p146
      %p148 = scmp.ne.s32.totalorder %s137, %s140
      %p149 = scmp.eq.s32.totalorder %s28, 1
      %p150 = por %p148, %p149
      %p151 = scmp.ne.s32.totalorder %s140, %s141
      %p152 = scmp.eq.s32.totalorder %s28, 0
      %p153 = por %p151, %p152
      %p154 = scmp.ne.s32.totalorder %s140, %s141
      %p155 = scmp.eq.s32.totalorder %s29, 1
      %p156 = por %p154, %p155
      %p158 = scmp.ne.s32.totalorder %s141, %s157
      %p159 = scmp.eq.s32.totalorder %s29, 0
      %p160 = por %p158, %p159
      %s161 = ssub.s32 %s23, %s30
      %p162 = scmp.eq.s32.totalorder %s161, 0
      %s164 = sadd.s32 %s163, 1
      %s165 = scalar_select %p162, %s163, %s164
      %p168 = pneg %p162
      %p169 = scmp.eq.s32.totalorder %s23, 1
      %p170 = por %p168, %p169
      %p171 = scmp.ne.s32.totalorder %s163, %s166
      %p172 = scmp.eq.s32.totalorder %s23, 0
      %p173 = por %p171, %p172
      %p174 = scmp.ne.s32.totalorder %s163, %s166
      %p175 = scmp.eq.s32.totalorder %s28, 1
      %p176 = por %p174, %p175
      %p177 = scmp.ne.s32.totalorder %s166, %s167
      %p178 = scmp.eq.s32.totalorder %s28, 0
      %p179 = por %p177, %p178
      %p180 = scmp.ne.s32.totalorder %s166, %s167
      %p181 = scmp.eq.s32.totalorder %s29, 1
      %p182 = por %p180, %p181
      %p184 = scmp.ne.s32.totalorder %s167, %s183
      %p185 = scmp.eq.s32.totalorder %s29, 0
      %p186 = por %p184, %p185
      %s188 = sadd.s32 %s187, 1
      %p191 = scmp.eq.s32.totalorder %s23, 1
      %p192 = scmp.ne.s32.totalorder %s187, %s189
      %p193 = scmp.eq.s32.totalorder %s23, 0
      %p194 = por %p192, %p193
      %p195 = scmp.ne.s32.totalorder %s187, %s189
      %p196 = scmp.eq.s32.totalorder %s28, 1
      %p197 = por %p195, %p196
      %p198 = scmp.ne.s32.totalorder %s189, %s190
      %p199 = scmp.eq.s32.totalorder %s28, 0
      %p200 = por %p198, %p199
      %p201 = scmp.ne.s32.totalorder %s189, %s190
      %p202 = scmp.eq.s32.totalorder %s29, 1
      %p203 = por %p201, %p202
      %p205 = scmp.ne.s32.totalorder %s190, %s204
      %p206 = scmp.eq.s32.totalorder %s29, 0
      %p207 = por %p205, %p206
      %s209 = sadd.s32 %s208, 1
      %p212 = scmp.eq.s32.totalorder %s23, 1
      %p213 = scmp.ne.s32.totalorder %s208, %s210
      %p214 = scmp.eq.s32.totalorder %s23, 0
      %p215 = por %p213, %p214
      %p216 = scmp.ne.s32.totalorder %s208, %s210
      %p217 = scmp.eq.s32.totalorder %s28, 1
      %p218 = por %p216, %p217
      %p219 = scmp.ne.s32.totalorder %s210, %s211
      %p220 = scmp.eq.s32.totalorder %s28, 0
      %p221 = por %p219, %p220
      %p222 = scmp.ne.s32.totalorder %s210, %s211
      %p223 = scmp.eq.s32.totalorder %s29, 1
      %p224 = por %p222, %p223
      %p226 = scmp.ne.s32.totalorder %s211, %s225
      %p227 = scmp.eq.s32.totalorder %s29, 0
      %p228 = por %p226, %p227
      %s229 = ssub.s32 %s23, %s30
      %p230 = scmp.eq.s32.totalorder %s229, 0
      %s232 = sadd.s32 %s231, 1
      %s233 = scalar_select %p230, %s231, %s232
      %p236 = pneg %p230
      %p237 = scmp.eq.s32.totalorder %s23, 1
      %p238 = por %p236, %p237
      %p239 = scmp.ne.s32.totalorder %s231, %s234
      %p240 = scmp.eq.s32.totalorder %s23, 0
      %p241 = por %p239, %p240
      %p242 = scmp.ne.s32.totalorder %s231, %s234
      %p243 = scmp.eq.s32.totalorder %s28, 1
      %p244 = por %p242, %p243
      %p245 = scmp.ne.s32.totalorder %s234, %s235
      %p246 = scmp.eq.s32.totalorder %s28, 0
      %p247 = por %p245, %p246
      %p248 = scmp.ne.s32.totalorder %s234, %s235
      %p249 = scmp.eq.s32.totalorder %s29, 1
      %p250 = por %p248, %p249
      %p252 = scmp.ne.s32.totalorder %s235, %s251
      %p253 = scmp.eq.s32.totalorder %s29, 0
      %p254 = por %p252, %p253
      %p255 = scmp.le.s32.totalorder 1, %s23
      %p256 = scmp.lt.s32.totalorder %s23, 3
      %p257 = pnand %p255, %p256
      %p258 = pneg %p257
      // Predicated region
      $region9: #{tpu_custom_call.1} parent=5 // pred_check
        _
      $region10: #{tpu_custom_call.1} parent=5 // pred_check_branch
        %260 = sbr.rel (%p257) target = $region12
      $region11: #{tpu_custom_call.1} parent=5 // pred_region
        %s261 = ssub.s32 %s23, 1
        // Predicated region
        $region13: #{tpu_custom_call.1} parent=11 // pred_check
          %p262 = pneg %p200
        $region14: #{tpu_custom_call.1} parent=11 // pred_check_branch
          %264 = sbr.rel (%p262) target = $region16
        $region15: #{tpu_custom_call.1} parent=11 // pred_region
          _
        $region16: #{tpu_custom_call.1} parent=11 // pred_fallthru
          _
        // Predicated region
        $region17: #{tpu_custom_call.1} parent=11 // pred_check
          %p265 = pneg %p221
        $region18: #{tpu_custom_call.1} parent=11 // pred_check_branch
          %267 = sbr.rel (%p265) target = $region20
        $region19: #{tpu_custom_call.1} parent=11 // pred_region
          _
        $region20: #{tpu_custom_call.1} parent=11 // pred_fallthru
          _
      $region12: #{tpu_custom_call.1} parent=5 // pred_fallthru
        _
      %p268 = scmp.lt.s32.totalorder %s23, 2
      // Predicated region
      $region21: #{tpu_custom_call.1} parent=5 // pred_check
        %p269 = pneg %p268
      $region22: #{tpu_custom_call.1} parent=5 // pred_check_branch
        %271 = sbr.rel (%p269) target = $region24
      $region23: #{tpu_custom_call.1} parent=5 // pred_region
        // Predicated region
        $region25: #{tpu_custom_call.1} parent=23 // pred_check
          %p272 = pneg %p43
        $region26: #{tpu_custom_call.1} parent=23 // pred_check_branch
          %274 = sbr.rel (%p272) target = $region28
        $region27: #{tpu_custom_call.1} parent=23 // pred_region
          %p275 = scmp.lt.s32.totalorder %s23, 1
          %s276 = scalar_select %p275, %s23, 1
          %s277 = smul.addr %s276, 8
          %s278 = scalar_lea.vmem %s0, %s277
        $region28: #{tpu_custom_call.1} parent=23 // pred_fallthru
          _
        // Predicated region
        $region29: #{tpu_custom_call.1} parent=23 // pred_check
          %p279 = pneg %p69
        $region30: #{tpu_custom_call.1} parent=23 // pred_check_branch
          %281 = sbr.rel (%p279) target = $region32
        $region31: #{tpu_custom_call.1} parent=23 // pred_region
          %p282 = scmp.lt.s32.totalorder %s23, 1
          %s283 = scalar_select %p282, %s23, 1
          %s284 = smul.addr %s283, 8
          %s285 = scalar_lea.vmem %s1, %s284
        $region32: #{tpu_custom_call.1} parent=23 // pred_fallthru
          _
        // Predicated region
        $region33: #{tpu_custom_call.1} parent=23 // pred_check
          %p286 = pneg %p95
        $region34: #{tpu_custom_call.1} parent=23 // pred_check_branch
          %288 = sbr.rel (%p286) target = $region36
        $region35: #{tpu_custom_call.1} parent=23 // pred_region
          %p289 = scmp.lt.s32.totalorder %s23, 1
          %s290 = scalar_select %p289, %s23, 1
          %s291 = smul.addr %s290, 8
          %s292 = scalar_lea.vmem %s2, %s291
        $region36: #{tpu_custom_call.1} parent=23 // pred_fallthru
          _
        // Predicated region
        $region37: #{tpu_custom_call.1} parent=23 // pred_check
          %p293 = pneg %p121
        $region38: #{tpu_custom_call.1} parent=23 // pred_check_branch
          %295 = sbr.rel (%p293) target = $region40
        $region39: #{tpu_custom_call.1} parent=23 // pred_region
          %s296 = sand.u32 %s111, 1
          %s297 = scalar_lea.sflag [#allocation3], %s296
          %s298 = sand.u32 %s111, 1
          %s299 = smul.addr %s298, 8
          %s300 = scalar_lea.vmem [#allocation2], %s299
          %s302 = ssub.s32 128, 128
          %303 = vsyncadd %s297, %s302
          %s304 = smul.addr %s23, 128
          %s305 = scalar_lea.hbm %s3, %s304
          %s307 = sshll.u32 %s300, 4
          %s308 = int_to_ptr.vmem [resolvable:$true] %s307
          %310 = dma.hbm_to_vmem [thread:$0]  %s305, 128, %s308, %s297
        $region40: #{tpu_custom_call.1} parent=23 // pred_fallthru
          _
        // Predicated region
        $region41: #{tpu_custom_call.1} parent=23 // pred_check
          %p311 = pneg %p147
        $region42: #{tpu_custom_call.1} parent=23 // pred_check_branch
          %313 = sbr.rel (%p311) target = $region44
        $region43: #{tpu_custom_call.1} parent=23 // pred_region
          %s314 = sand.u32 %s23, 1
          %s315 = scalar_lea.sflag [#allocation6], %s314
          %s316 = sand.u32 %s137, 1
          %s317 = smul.addr %s316, 8
          %s318 = scalar_lea.vmem [#allocation5], %s317
          %s320 = ssub.s32 128, 128
          %321 = vsyncadd %s315, %s320
          %s322 = smul.addr %s23, 128
          %s323 = scalar_lea.hbm %s4, %s322
          %s325 = sshll.u32 %s318, 4
          %s326 = int_to_ptr.vmem [resolvable:$true] %s325
          %328 = dma.hbm_to_vmem [thread:$0]  %s323, 128, %s326, %s315
        $region44: #{tpu_custom_call.1} parent=23 // pred_fallthru
          _
        // Predicated region
        $region45: #{tpu_custom_call.1} parent=23 // pred_check
          %p329 = pneg %p173
        $region46: #{tpu_custom_call.1} parent=23 // pred_check_branch
          %331 = sbr.rel (%p329) target = $region48
        $region47: #{tpu_custom_call.1} parent=23 // pred_region
          %s332 = sand.u32 %s23, 1
          %s333 = scalar_lea.sflag [#allocation6], %s332
          %s334 = sand.u32 %s163, 1
          %s335 = smul.addr %s334, 8
          %s336 = scalar_lea.vmem [#allocation7], %s335
          %s338 = ssub.s32 128, 128
          %339 = vsyncadd %s333, %s338
          %s340 = smul.addr %s23, 128
          %s341 = scalar_lea.hbm %s5, %s340
          %s343 = sshll.u32 %s336, 4
          %s344 = int_to_ptr.vmem [resolvable:$true] %s343
          %346 = dma.hbm_to_vmem [thread:$0]  %s341, 128, %s344, %s333
        $region48: #{tpu_custom_call.1} parent=23 // pred_fallthru
          _
      $region24: #{tpu_custom_call.1} parent=5 // pred_fallthru
        _
      %p347 = scmp.le.s32.totalorder 1, %s23
      %p348 = scmp.lt.s32.totalorder %s23, 3
      %p349 = pnand %p347, %p348
      %p350 = pneg %p349
      // Predicated region
      $region49: #{tpu_custom_call.1} parent=5 // pred_check
        _
      $region50: #{tpu_custom_call.1} parent=5 // pred_check_branch
        %352 = sbr.rel (%p349) target = $region52
      $region51: #{tpu_custom_call.1} parent=5 // pred_region
        %s353 = ssub.s32 %s23, 1
        %s354 = sand.u32 %s114, 1
        %s355 = scalar_lea.sflag [#allocation3], %s354
        %s356 = sand.u32 %s114, 1
        %s357 = smul.addr %s356, 8
        %s358 = scalar_lea.vmem [#allocation2], %s357
        // Predicated region
        $region53: #{tpu_custom_call.1} parent=51 // pred_check
          %p359 = pneg %p127
        $region54: #{tpu_custom_call.1} parent=51 // pred_check_branch
          %361 = sbr.rel (%p359) target = $region56
        $region55: #{tpu_custom_call.1} parent=51 // pred_region
          %362 = dma.done %s355, 128
        $region56: #{tpu_custom_call.1} parent=51 // pred_fallthru
          _
        %s363 = sand.u32 %s28, 1
        %s364 = scalar_lea.sflag [#allocation6], %s363
        %s365 = sand.u32 %s140, 1
        %s366 = smul.addr %s365, 8
        %s367 = scalar_lea.vmem [#allocation5], %s366
        // Predicated region
        $region57: #{tpu_custom_call.1} parent=51 // pred_check
          %p368 = pneg %p153
        $region58: #{tpu_custom_call.1} parent=51 // pred_check_branch
          %370 = sbr.rel (%p368) target = $region60
        $region59: #{tpu_custom_call.1} parent=51 // pred_region
          %371 = dma.done %s364, 128
        $region60: #{tpu_custom_call.1} parent=51 // pred_fallthru
          _
        %s372 = sand.u32 %s28, 1
        %s373 = scalar_lea.sflag [#allocation6], %s372
        %s374 = sand.u32 %s166, 1
        %s375 = smul.addr %s374, 8
        %s376 = scalar_lea.vmem [#allocation7], %s375
        // Predicated region
        $region61: #{tpu_custom_call.1} parent=51 // pred_check
          %p377 = pneg %p179
        $region62: #{tpu_custom_call.1} parent=51 // pred_check_branch
          %379 = sbr.rel (%p377) target = $region64
        $region63: #{tpu_custom_call.1} parent=51 // pred_region
          %380 = dma.done %s373, 128
        $region64: #{tpu_custom_call.1} parent=51 // pred_fallthru
          _
        %p381 = scmp.lt.s32.totalorder %s28, 1
        %s382 = scalar_select %p381, %s28, 1
        %s383 = smul.addr %s382, 8
        %s384 = scalar_lea.vmem %s0, %s383
        %p385 = pneg %p49
        %p386 = pneg %p46
        %p387 = scmp.lt.s32.totalorder %s28, 1
        %s388 = scalar_select %p387, %s28, 1
        %s389 = smul.addr %s388, 8
        %s390 = scalar_lea.vmem %s1, %s389
        %p391 = pneg %p75
        %p392 = pneg %p72
        %p393 = scmp.lt.s32.totalorder %s28, 1
        %s394 = scalar_select %p393, %s28, 1
        %s395 = smul.addr %s394, 8
        %s396 = scalar_lea.vmem %s2, %s395
        %p397 = pneg %p101
        %p398 = pneg %p98
        %s399 = sand.u32 %s114, 1
        %s400 = scalar_lea.sflag [#allocation3], %s399
        %s401 = sand.u32 %s114, 1
        %s402 = smul.addr %s401, 8
        %s403 = scalar_lea.vmem [#allocation2], %s402
        %p404 = pneg %p127
        %p405 = pneg %p124
        %s406 = sand.u32 %s28, 1
        %s407 = scalar_lea.sflag [#allocation6], %s406
        %s408 = sand.u32 %s140, 1
        %s409 = smul.addr %s408, 8
        %s410 = scalar_lea.vmem [#allocation5], %s409
        %p411 = pneg %p153
        %p412 = pneg %p150
        %s413 = sand.u32 %s28, 1
        %s414 = scalar_lea.sflag [#allocation6], %s413
        %s415 = sand.u32 %s166, 1
        %s416 = smul.addr %s415, 8
        %s417 = scalar_lea.vmem [#allocation7], %s416
        %p418 = pneg %p179
        %p419 = pneg %p176
        %p420 = pneg %p200
        %p421 = pneg %p197
        %p422 = pneg %p221
        %p423 = pneg %p218
        %p424 = pneg %p247
        %p425 = pneg %p244
        %s426 = sand.u32 %s234, 1
        %s427 = scalar_lea.sflag [#allocation4], %s426
        %s428 = sand.u32 %s234, 1
        %s429 = scalar_lea.vmem [#allocation8], %s428
        %p430 = scmp.lt.s32.totalorder %s28, 1
        %s431 = scalar_select %p430, %s28, 1
        %s432 = smul.addr %s431, 8
        %s433 = scalar_lea.vmem %s0, %s432
        %p434 = scmp.lt.s32.totalorder %s28, 1
        %s435 = scalar_select %p434, %s28, 1
        %s436 = smul.addr %s435, 8
        %s437 = scalar_lea.vmem %s1, %s436
        %p438 = scmp.lt.s32.totalorder %s28, 1
        %s439 = scalar_select %p438, %s28, 1
        %s440 = smul.addr %s439, 8
        %s441 = scalar_lea.vmem %s2, %s440
        %v442 = vld [vmem:[%s433] sm:$0xff]
        %v443 = vld [vmem:[%s437] sm:$0xff]
        %v444 = vld [vmem:[%s441] sm:$0xff]
        %v445 = vld [vmem:[%s358] sm:$0xff]
        %v446 = vld [vmem:[%s367] sm:$0xff]
        %v447 = vld [vmem:[%s376] sm:$0xff]
        %v448 = vsub.f32 %v442, %v444
        %v449 = vsub.f32 %v443, %v445
        %v450 = vadd.f32 %v446, 1.0
        %v451 = vmul.f32 %v450, %v448
        %v452 = vmul.f32 %v451, %v448
        %v453 = vadd.f32 %v447, 1.0
        %v454 = vmul.f32 %v453, %v449
        %v455 = vmul.f32 %v454, %v449
        %v456 = vadd.f32 %v452, %v455
        %vm457 = vcmask 261120
        %v458 = vsel %vm457, %v456, 0.0
        %459 = vadd.xlane.f32.xlu0 %v458
        %v460 = vpop.xlane.xlu0 %459
        %v461 = vrot.slane %v460, 4
        %v462 = vadd.f32 %v460, %v461
        %v463 = vrot.slane %v462, 2
        %v464 = vadd.f32 %v462, %v463
        %v465 = vrot.slane %v464, 1
        %v466 = vadd.f32 %v464, %v465
        %s467 = vtos %v466
        %v468 = vld [vmem:[%s6] sm:$0xff]
        %v469 = vld [vmem:[%s6 + $0x8] sm:$0xff]
        %v470 = vld [vmem:[%s6 + $0x10] sm:$0xff]
        %v471 = vld [vmem:[%s6 + $0x18] sm:$0xff]
        %v472 = vld [vmem:[%s7] sm:$0x1]
        %v474 = vlaneseq
        %v475 = vshrl.u32 %v474, 7
        %v476 = vsub.s32 0, %v475
        %v477 = vrot.slane %v472, %v476
        %v480 = vsel %vm457, %v442, 0
        %482 = vmatprep.subr.mxu0 0.0
        %483 = vmatpush1.msra.mxu0 0.0
        %484 = vmatprep.subr.mxu0 0.0
        %485 = vmatpush1.msra.mxu0 0.0
        %486 = vmatprep.subr.mxu0 0.0
        %487 = vmatpush1.msra.mxu0 0.0
        %488 = vmatprep.subr.mxu0 0.0
        %489 = vmatpush1.msra.mxu0 0.0
        %490 = vmatprep.subr.mxu0 0.0
        %491 = vmatpush1.msra.mxu0 0.0
        %492 = vmatprep.subr.mxu0 0.0
        %493 = vmatpush1.msra.mxu0 0.0
        %494 = vmatprep.subr.mxu0 0.0
        %495 = vmatpush1.msra.mxu0 0.0
        %496 = vmatprep.subr.mxu0 0.0
        %497 = vmatpush1.msra.mxu0 0.0
        %498 = vmatprep.subr.mxu0 0.0
        %499 = vmatpush1.msra.mxu0 0.0
        %500 = vmatprep.subr.mxu0 0.0
        %501 = vmatpush1.msra.mxu0 0.0
        %502 = vmatprep.subr.mxu0 0.0
        %503 = vmatpush1.msra.mxu0 0.0
        %504 = vmatprep.subr.mxu0 0.0
        %505 = vmatpush1.msra.mxu0 0.0
        %506 = vmatprep.subr.mxu0 0.0
        %507 = vmatpush1.msra.mxu0 %v471
        %508 = vmatprep.subr.mxu0 0.0
        %509 = vmatpush1.msra.mxu0 %v470
        %510 = vmatprep.subr.mxu0 0.0
        %511 = vmatpush1.msra.mxu0 %v469
        %512 = vmatprep.subr.mxu0 0.0
        %513 = vmatpush1.msra.mxu0 %v468
        %514 = vmatprep.subr.mxu0 0.0
        %515 = vmatpush2.msra.mxu0 0.0
        %516 = vmatprep.subr.mxu0 0.0
        %517 = vmatpush2.msra.mxu0 0.0
        %518 = vmatprep.subr.mxu0 0.0
        %519 = vmatpush2.msra.mxu0 0.0
        %520 = vmatprep.subr.mxu0 0.0
        %521 = vmatpush2.msra.mxu0 0.0
        %522 = vmatprep.subr.mxu0 0.0
        %523 = vmatpush2.msra.mxu0 0.0
        %524 = vmatprep.subr.mxu0 0.0
        %525 = vmatpush2.msra.mxu0 0.0
        %526 = vmatprep.subr.mxu0 0.0
        %527 = vmatpush2.msra.mxu0 0.0
        %528 = vmatprep.subr.mxu0 0.0
        %529 = vmatpush2.msra.mxu0 0.0
        %530 = vmatprep.subr.mxu0 0.0
        %531 = vmatpush2.msra.mxu0 0.0
        %532 = vmatprep.subr.mxu0 0.0
        %533 = vmatpush2.msra.mxu0 0.0
        %534 = vmatprep.subr.mxu0 0.0
        %535 = vmatpush2.msra.mxu0 0.0
        %536 = vmatprep.subr.mxu0 0.0
        %537 = vmatpush2.msra.mxu0 0.0
        %538 = vmatprep.subr.mxu0 0.0
        %539 = vmatpush2.msra.mxu0 0.0
        %540 = vmatprep.subr.mxu0 0.0
        %541 = vmatpush2.msra.mxu0 0.0
        %542 = vmatprep.subr.mxu0 0.0
        %543 = vmatpush2.msra.mxu0 0.0
        %544 = vmatprep.subr.mxu0 0.0
        %545 = vmatpush2.msra.mxu0 0.0
        %546 = vmatprep.mubr.f32.mxu0 0.0
        %547 = vmatmul.mubr.f32.gmra.mxu0 %v480
        %v548 = vpop.f32.mrf.mxu0
        %v549 = vadd.f32 %v477, %v548
        %v550 = vpop.f32.mrf.mxu0
        %551 = vdwg.mxu0
        %v553 = vsel %vm457, %v443, 0
        %555 = vmatprep.subr.mxu0 0.0
        %556 = vmatpush1.msra.mxu0 0.0
        %557 = vmatprep.subr.mxu0 0.0
        %558 = vmatpush1.msra.mxu0 0.0
        %559 = vmatprep.subr.mxu0 0.0
        %560 = vmatpush1.msra.mxu0 0.0
        %561 = vmatprep.subr.mxu0 0.0
        %562 = vmatpush1.msra.mxu0 0.0
        %563 = vmatprep.subr.mxu0 0.0
        %564 = vmatpush1.msra.mxu0 0.0
        %565 = vmatprep.subr.mxu0 0.0
        %566 = vmatpush1.msra.mxu0 0.0
        %567 = vmatprep.subr.mxu0 0.0
        %568 = vmatpush1.msra.mxu0 0.0
        %569 = vmatprep.subr.mxu0 0.0
        %570 = vmatpush1.msra.mxu0 0.0
        %571 = vmatprep.subr.mxu0 0.0
        %572 = vmatpush1.msra.mxu0 0.0
        %573 = vmatprep.subr.mxu0 0.0
        %574 = vmatpush1.msra.mxu0 0.0
        %575 = vmatprep.subr.mxu0 0.0
        %576 = vmatpush1.msra.mxu0 0.0
        %577 = vmatprep.subr.mxu0 0.0
        %578 = vmatpush1.msra.mxu0 0.0
        %579 = vmatprep.subr.mxu0 0.0
        %580 = vmatpush1.msra.mxu0 %v471
        %581 = vmatprep.subr.mxu0 0.0
        %582 = vmatpush1.msra.mxu0 %v470
        %583 = vmatprep.subr.mxu0 0.0
        %584 = vmatpush1.msra.mxu0 %v469
        %585 = vmatprep.subr.mxu0 0.0
        %586 = vmatpush1.msra.mxu0 %v468
        %587 = vmatprep.subr.mxu0 0.0
        %588 = vmatpush2.msra.mxu0 0.0
        %589 = vmatprep.subr.mxu0 0.0
        %590 = vmatpush2.msra.mxu0 0.0
        %591 = vmatprep.subr.mxu0 0.0
        %592 = vmatpush2.msra.mxu0 0.0
        %593 = vmatprep.subr.mxu0 0.0
        %594 = vmatpush2.msra.mxu0 0.0
        %595 = vmatprep.subr.mxu0 0.0
        %596 = vmatpush2.msra.mxu0 0.0
        %597 = vmatprep.subr.mxu0 0.0
        %598 = vmatpush2.msra.mxu0 0.0
        %599 = vmatprep.subr.mxu0 0.0
        %600 = vmatpush2.msra.mxu0 0.0
        %601 = vmatprep.subr.mxu0 0.0
        %602 = vmatpush2.msra.mxu0 0.0
        %603 = vmatprep.subr.mxu0 0.0
        %604 = vmatpush2.msra.mxu0 0.0
        %605 = vmatprep.subr.mxu0 0.0
        %606 = vmatpush2.msra.mxu0 0.0
        %607 = vmatprep.subr.mxu0 0.0
        %608 = vmatpush2.msra.mxu0 0.0
        %609 = vmatprep.subr.mxu0 0.0
        %610 = vmatpush2.msra.mxu0 0.0
        %611 = vmatprep.subr.mxu0 0.0
        %612 = vmatpush2.msra.mxu0 0.0
        %613 = vmatprep.subr.mxu0 0.0
        %614 = vmatpush2.msra.mxu0 0.0
        %615 = vmatprep.subr.mxu0 0.0
        %616 = vmatpush2.msra.mxu0 0.0
        %617 = vmatprep.subr.mxu0 0.0
        %618 = vmatpush2.msra.mxu0 0.0
        %619 = vmatprep.mubr.f32.mxu0 0.0
        %620 = vmatmul.mubr.f32.gmra.mxu0 %v553
        %v621 = vpop.f32.mrf.mxu0
        %v622 = vadd.f32 %v477, %v621
        %v623 = vpop.f32.mrf.mxu0
        %624 = vdwg.mxu0
        %v626 = vsel %vm457, %v444, 0
        %628 = vmatprep.subr.mxu0 0.0
        %629 = vmatpush1.msra.mxu0 0.0
        %630 = vmatprep.subr.mxu0 0.0
        %631 = vmatpush1.msra.mxu0 0.0
        %632 = vmatprep.subr.mxu0 0.0
        %633 = vmatpush1.msra.mxu0 0.0
        %634 = vmatprep.subr.mxu0 0.0
        %635 = vmatpush1.msra.mxu0 0.0
        %636 = vmatprep.subr.mxu0 0.0
        %637 = vmatpush1.msra.mxu0 0.0
        %638 = vmatprep.subr.mxu0 0.0
        %639 = vmatpush1.msra.mxu0 0.0
        %640 = vmatprep.subr.mxu0 0.0
        %641 = vmatpush1.msra.mxu0 0.0
        %642 = vmatprep.subr.mxu0 0.0
        %643 = vmatpush1.msra.mxu0 0.0
        %644 = vmatprep.subr.mxu0 0.0
        %645 = vmatpush1.msra.mxu0 0.0
        %646 = vmatprep.subr.mxu0 0.0
        %647 = vmatpush1.msra.mxu0 0.0
        %648 = vmatprep.subr.mxu0 0.0
        %649 = vmatpush1.msra.mxu0 0.0
        %650 = vmatprep.subr.mxu0 0.0
        %651 = vmatpush1.msra.mxu0 0.0
        %652 = vmatprep.subr.mxu0 0.0
        %653 = vmatpush1.msra.mxu0 %v471
        %654 = vmatprep.subr.mxu0 0.0
        %655 = vmatpush1.msra.mxu0 %v470
        %656 = vmatprep.subr.mxu0 0.0
        %657 = vmatpush1.msra.mxu0 %v469
        %658 = vmatprep.subr.mxu0 0.0
        %659 = vmatpush1.msra.mxu0 %v468
        %660 = vmatprep.subr.mxu0 0.0
        %661 = vmatpush2.msra.mxu0 0.0
        %662 = vmatprep.subr.mxu0 0.0
        %663 = vmatpush2.msra.mxu0 0.0
        %664 = vmatprep.subr.mxu0 0.0
        %665 = vmatpush2.msra.mxu0 0.0
        %666 = vmatprep.subr.mxu0 0.0
        %667 = vmatpush2.msra.mxu0 0.0
        %668 = vmatprep.subr.mxu0 0.0
        %669 = vmatpush2.msra.mxu0 0.0
        %670 = vmatprep.subr.mxu0 0.0
        %671 = vmatpush2.msra.mxu0 0.0
        %672 = vmatprep.subr.mxu0 0.0
        %673 = vmatpush2.msra.mxu0 0.0
        %674 = vmatprep.subr.mxu0 0.0
        %675 = vmatpush2.msra.mxu0 0.0
        %676 = vmatprep.subr.mxu0 0.0
        %677 = vmatpush2.msra.mxu0 0.0
        %678 = vmatprep.subr.mxu0 0.0
        %679 = vmatpush2.msra.mxu0 0.0
        %680 = vmatprep.subr.mxu0 0.0
        %681 = vmatpush2.msra.mxu0 0.0
        %682 = vmatprep.subr.mxu0 0.0
        %683 = vmatpush2.msra.mxu0 0.0
        %684 = vmatprep.subr.mxu0 0.0
        %685 = vmatpush2.msra.mxu0 0.0
        %686 = vmatprep.subr.mxu0 0.0
        %687 = vmatpush2.msra.mxu0 0.0
        %688 = vmatprep.subr.mxu0 0.0
        %689 = vmatpush2.msra.mxu0 0.0
        %690 = vmatprep.subr.mxu0 0.0
        %691 = vmatpush2.msra.mxu0 0.0
        %692 = vmatprep.mubr.f32.mxu0 0.0
        %693 = vmatmul.mubr.f32.gmra.mxu0 %v626
        %v694 = vpop.f32.mrf.mxu0
        %v695 = vadd.f32 %v477, %v694
        %v696 = vpop.f32.mrf.mxu0
        %697 = vdwg.mxu0
        %v699 = vsel %vm457, %v445, 0
        %701 = vmatprep.subr.mxu0 0.0
        %702 = vmatpush1.msra.mxu0 0.0
        %703 = vmatprep.subr.mxu0 0.0
        %704 = vmatpush1.msra.mxu0 0.0
        %705 = vmatprep.subr.mxu0 0.0
        %706 = vmatpush1.msra.mxu0 0.0
        %707 = vmatprep.subr.mxu0 0.0
        %708 = vmatpush1.msra.mxu0 0.0
        %709 = vmatprep.subr.mxu0 0.0
        %710 = vmatpush1.msra.mxu0 0.0
        %711 = vmatprep.subr.mxu0 0.0
        %712 = vmatpush1.msra.mxu0 0.0
        %713 = vmatprep.subr.mxu0 0.0
        %714 = vmatpush1.msra.mxu0 0.0
        %715 = vmatprep.subr.mxu0 0.0
        %716 = vmatpush1.msra.mxu0 0.0
        %717 = vmatprep.subr.mxu0 0.0
        %718 = vmatpush1.msra.mxu0 0.0
        %719 = vmatprep.subr.mxu0 0.0
        %720 = vmatpush1.msra.mxu0 0.0
        %721 = vmatprep.subr.mxu0 0.0
        %722 = vmatpush1.msra.mxu0 0.0
        %723 = vmatprep.subr.mxu0 0.0
        %724 = vmatpush1.msra.mxu0 0.0
        %725 = vmatprep.subr.mxu0 0.0
        %726 = vmatpush1.msra.mxu0 %v471
        %727 = vmatprep.subr.mxu0 0.0
        %728 = vmatpush1.msra.mxu0 %v470
        %729 = vmatprep.subr.mxu0 0.0
        %730 = vmatpush1.msra.mxu0 %v469
        %731 = vmatprep.subr.mxu0 0.0
        %732 = vmatpush1.msra.mxu0 %v468
        %733 = vmatprep.subr.mxu0 0.0
        %734 = vmatpush2.msra.mxu0 0.0
        %735 = vmatprep.subr.mxu0 0.0
        %736 = vmatpush2.msra.mxu0 0.0
        %737 = vmatprep.subr.mxu0 0.0
        %738 = vmatpush2.msra.mxu0 0.0
        %739 = vmatprep.subr.mxu0 0.0
        %740 = vmatpush2.msra.mxu0 0.0
        %741 = vmatprep.subr.mxu0 0.0
        %742 = vmatpush2.msra.mxu0 0.0
        %743 = vmatprep.subr.mxu0 0.0
        %744 = vmatpush2.msra.mxu0 0.0
        %745 = vmatprep.subr.mxu0 0.0
        %746 = vmatpush2.msra.mxu0 0.0
        %747 = vmatprep.subr.mxu0 0.0
        %748 = vmatpush2.msra.mxu0 0.0
        %749 = vmatprep.subr.mxu0 0.0
        %750 = vmatpush2.msra.mxu0 0.0
        %751 = vmatprep.subr.mxu0 0.0
        %752 = vmatpush2.msra.mxu0 0.0
        %753 = vmatprep.subr.mxu0 0.0
        %754 = vmatpush2.msra.mxu0 0.0
        %755 = vmatprep.subr.mxu0 0.0
        %756 = vmatpush2.msra.mxu0 0.0
        %757 = vmatprep.subr.mxu0 0.0
        %758 = vmatpush2.msra.mxu0 0.0
        %759 = vmatprep.subr.mxu0 0.0
        %760 = vmatpush2.msra.mxu0 0.0
        %761 = vmatprep.subr.mxu0 0.0
        %762 = vmatpush2.msra.mxu0 0.0
        %763 = vmatprep.subr.mxu0 0.0
        %764 = vmatpush2.msra.mxu0 0.0
        %765 = vmatprep.mubr.f32.mxu0 0.0
        %766 = vmatmul.mubr.f32.gmra.mxu0 %v699
        %v767 = vpop.f32.mrf.mxu0
        %v768 = vadd.f32 %v477, %v767
        %v769 = vpop.f32.mrf.mxu0
        %770 = vdwg.mxu0
        %v771 = vsub.f32 %v549, %v695
        %v772 = vsub.f32 %v622, %v768
        %v773 = vmul.f32 %v771, %v771
        %v774 = vmul.f32 %v772, %v772
        %v775 = vadd.f32 %v773, %v774
        %vm776 = vcmask 80896
        %v777 = vsel %vm776, %v775, 0.0
        %778 = vadd.xlane.f32.xlu0 %v777
        %v779 = vpop.xlane.xlu0 %778
        %v780 = vrot.slane %v779, 4
        %v781 = vadd.f32 %v779, %v780
        %v782 = vrot.slane %v781, 2
        %v783 = vadd.f32 %v781, %v782
        %v784 = vrot.slane %v783, 1
        %v785 = vadd.f32 %v783, %v784
        %s786 = vtos %v785
        %s787 = smul.f32 %s467, 0.0009765625
        %s788 = smul.f32 %s786, 0.003125
        %s789 = sadd.f32 %s787, %s788
        %v790 = vstv %s789
        %791 = vst [vmem:[%s429] sm:$0x1] %v790
        %s792 = sand.u32 %s234, 1
        %s793 = scalar_lea.sflag [#allocation4], %s792
        %s794 = sand.u32 %s234, 1
        %s795 = scalar_lea.vmem [#allocation8], %s794
        // Predicated region
        $region65: #{tpu_custom_call.1} parent=51 // pred_check
          %p796 = pneg %p244
        $region66: #{tpu_custom_call.1} parent=51 // pred_check_branch
          %798 = sbr.rel (%p796) target = $region68
        $region67: #{tpu_custom_call.1} parent=51 // pred_region
          %s800 = ssub.s32 16, 16
          %801 = vsyncadd %s793, %s800
          %s802 = smul.addr %s28, 16
          %s803 = scalar_lea.hbm %s8, %s802
          %s805 = sshll.u32 %s795, 4
          %s806 = int_to_ptr.vmem [resolvable:$true] %s805
          %808 = dma.vmem_to_hbm [thread:$0]  %s806, 16, %s803, %s793
        $region68: #{tpu_custom_call.1} parent=51 // pred_fallthru
          _
      $region52: #{tpu_custom_call.1} parent=5 // pred_fallthru
        _
      %p809 = scmp.le.s32.totalorder 2, %s23
      // Predicated region
      $region69: #{tpu_custom_call.1} parent=5 // pred_check
        %p810 = pneg %p809
      $region70: #{tpu_custom_call.1} parent=5 // pred_check_branch
        %812 = sbr.rel (%p810) target = $region72
      $region71: #{tpu_custom_call.1} parent=5 // pred_region
        %s813 = ssub.s32 %s23, 2
        // Predicated region
        $region73: #{tpu_custom_call.1} parent=71 // pred_check
          %p814 = pneg %p250
        $region74: #{tpu_custom_call.1} parent=71 // pred_check_branch
          %816 = sbr.rel (%p814) target = $region76
        $region75: #{tpu_custom_call.1} parent=71 // pred_region
          %s817 = sand.u32 %s235, 1
          %s818 = scalar_lea.sflag [#allocation4], %s817
          %s819 = sand.u32 %s235, 1
          %s820 = scalar_lea.vmem [#allocation8], %s819
          %821 = dma.done %s818, 16
        $region76: #{tpu_custom_call.1} parent=71 // pred_fallthru
          _
      $region72: #{tpu_custom_call.1} parent=5 // pred_fallthru
        _
    $region6: #{tpu_custom_call.1} parent=1 // loop_footer
      %s27 = sadd.s32 1, %s23
    $region7: #{tpu_custom_call.1} parent=1 // loop_footer_branch
      %22 = sbr.rel target = $region3
    $region8: #{tpu_custom_call.1} parent=1 // loop_exit
      _
    %822 = vsyncpa [#allocation3], 1
    %s823 = scalar_lea.sflag [#allocation3], 1
    %824 = vsyncpa %s823, 1
    %825 = vsyncpa [#allocation6], 1
    %s826 = scalar_lea.sflag [#allocation6], 1
    %827 = vsyncpa %s826, 1
    %828 = vsyncpa [#allocation4], 1
    %s829 = scalar_lea.sflag [#allocation4], 1
    %830 = vsyncpa %s829, 1

</llo_original>
